<compile_context>
chip_gen: v6e
topology: v6e:2x2x1
jax: 0.10.0
libtpu: 0.0.40
codegen_flags: <defaults>
</compile_context>

<pallas_src>
import functools

import jax
import jax.numpy as jnp
from jax.experimental import pallas as pl
from jax.experimental.pallas import tpu as pltpu


def _round_up(x: int, m: int) -> int:
    return ((x + m - 1) // m) * m


_TC_PER_CHIP = None


def _tensorcores_per_chip() -> int:
    """2 for chips whose 'parallel' grid axis is split across TensorCores."""
    global _TC_PER_CHIP
    if _TC_PER_CHIP is None:
        try:
            kind = jax.devices()[0].device_kind.lower()
            _TC_PER_CHIP = 2 if ("v7" in kind or "v4" in kind or "v5p" in kind) else 1
        except Exception:  # unknown platform -> conservative single core
            _TC_PER_CHIP = 1
    return _TC_PER_CHIP


def _choose_tile_rows(n_rows: int, requested: int) -> int:
    """Row-tile selection.

    * Single-TC chips (v5e/v6e): never shrink the tile for "parallelism"; small
      inputs get one full block (block shape == array shape, exempt from the
      (8,128) divisibility rule).
    * 2-TC chips (v7x, v4/v5p megacore): keep tiles large but ensure the
      'parallel' grid axis has at least 2 tiles for decent-size inputs.
    Multi-tile tiles are multiples of 128 so the transposed (S, tile) output
    block stays lane-aligned; the last block may be partial (Pallas masks it).
    """
    requested = max(128, (int(requested) // 128) * 128)
    if _tensorcores_per_chip() > 1 and n_rows >= 1024:
        per_core = -(-n_rows // 2)
        return min(requested, _round_up(per_core, 128))
    if n_rows <= requested:
        return n_rows
    return requested


def _make_mlp_kernel(n_layers: int):
    """Whole-MLP kernel for one tile of rows.

    Ref order (n_layers > 1):
      (x, t, w0_feat, w0_time, b0, w1, b1, ..., w_last_T, b_last_T, out_T)
    Ref order (n_layers == 1):
      (x, t, w0_feat, w0_time, b0, out)
    """

    def kernel(x_ref, t_ref, *refs):
        out_ref = refs[-1]
        p = refs[:-1]

        x = x_ref[...]
        t = t_ref[...]

        # First layer with the [features | time] concat fused away:
        #   [x | t] @ W0 + b0 == x @ W0[:F] + t * W0[F:F+1] + b0.
        # Operands go to the MXU in their native dtype; accumulation is f32.
        h = jnp.dot(x, p[0][...], preferred_element_type=jnp.float32)
        h = h + t * p[1][...] + p[2][...]

        if n_layers == 1:
            # Degenerate head (n_hidden_dimensions == 0): the first layer is the
            # output layer — no ReLU, plain [N, S] store.
            out_ref[...] = h.astype(out_ref.dtype)
            return

        h = jnp.maximum(h, 0.0)
        idx = 3
        for _ in range(1, n_layers - 1):
            w = p[idx][...]
            b = p[idx + 1][...]
            idx += 2
            h = jnp.maximum(jnp.dot(h, w, preferred_element_type=jnp.float32) + b, 0.0)

        # Last layer computed directly in transposed orientation so the output
        # block (S, tile) is lane-dense (full vst's instead of 3/128 masked
        # lanes):  out_T[s, n] = sum_h W_last_T[s, h] * h[n, h]   (q @ k^T form).
        w_last_t = p[idx][...]       # [S, H], f32
        b_last_t = p[idx + 1][...]   # [S, 1], f32
        out_t = jax.lax.dot_general(
            w_last_t, h,
            dimension_numbers=(((1,), (1,)), ((), ())),
            preferred_element_type=jnp.float32,
        ) + b_last_t
        out_ref[...] = out_t.astype(out_ref.dtype)

    return kernel


def init_mlp_params(key, input_dim, hidden_dim, n_hidden, spatial_dim, dtype=jnp.float32):
    """Init mimicking nn.Linear's uniform(-1/sqrt(fan_in), 1/sqrt(fan_in)).

    Weights are stored transposed relative to PyTorch: [in_dim, out_dim];
    biases are [1, out_dim].
    """
    in_dims = [input_dim] + [hidden_dim] * n_hidden
    out_dims = [hidden_dim] * n_hidden + [spatial_dim]
    params = []
    for in_d, out_d in zip(in_dims, out_dims):
        key, kw, kb = jax.random.split(key, 3)
        bound = 1.0 / jnp.sqrt(jnp.asarray(in_d, dtype))
        w = jax.random.uniform(kw, (in_d, out_d), dtype, minval=-bound, maxval=bound)
        b = jax.random.uniform(kb, (1, out_d), dtype, minval=-bound, maxval=bound)
        params.append((w, b))
    return params


@functools.partial(jax.jit, static_argnames=("tile_rows",))
def mace_mlp_score_prediction_head(flat_node_features, flat_times, params, tile_rows=4096):
    """Pallas implementation of MaceMLPScorePredictionHead.forward.

    Args:
      flat_node_features: [N, F]  (N = batch_size * number_of_atoms), f32/bf16.
      flat_times:         [N, 1]
      params: list of (W [in, out], b [1, out]) tuples (weights transposed vs
              torch). First-layer fan_in must be F + 1 (node features + time).

    Returns:
      flat_scores: [N, spatial_dimension]
    """
    n_rows, n_feat = flat_node_features.shape
    n_layers = len(params)
    spatial_dim = params[-1][0].shape[1]
    assert params[0][0].shape[0] == n_feat + 1, "first-layer fan_in must be F + 1"
    for w, b in params:
        assert w.ndim == 2 and b.shape == (1, w.shape[1]), (
            "weights must be [in, out] (transposed vs torch), biases [1, out]")

    out_dtype = jnp.result_type(
        flat_node_features.dtype, flat_times.dtype, *(w.dtype for w, _ in params))

    tile = _choose_tile_rows(n_rows, tile_rows)
    num_tiles = -(-n_rows // tile)

    # First layer split so the [features | time] concat never materializes.
    w0, b0 = params[0]
    w0_feat = w0[:n_feat, :]             # [F, H]   ([F, S] when n_layers == 1)
    w0_time = w0[n_feat:n_feat + 1, :]   # [1, H]
    flat_params = [w0_feat, w0_time, b0]
    if n_layers > 1:
        # Hidden / last layers always multiply f32 accumulators: cast ONCE here
        # instead of every grid step inside the kernel.
        for w, b in params[1:-1]:
            flat_params.extend([w.astype(jnp.float32), b.astype(jnp.float32)])
        w_last, b_last = params[-1]
        flat_params.extend([
            w_last.T.astype(jnp.float32),                         # [S, H]
            b_last.reshape(spatial_dim, 1).astype(jnp.float32),   # [S, 1]
        ])

    in_specs = [
        pl.BlockSpec((tile, n_feat), lambda i: (i, 0)),  # node-feature row tile
        pl.BlockSpec((tile, 1), lambda i: (i, 0)),       # time row tile
    ]
    # Weights/biases: constant-index full blocks, resident across grid steps.
    in_specs += [pl.BlockSpec(prm.shape, lambda i: (0, 0)) for prm in flat_params]

    transposed_out = n_layers > 1
    if transposed_out:
        out_specs = pl.BlockSpec((spatial_dim, tile), lambda i: (0, i))
        out_shape = jax.ShapeDtypeStruct((spatial_dim, n_rows), out_dtype)
    else:
        out_specs = pl.BlockSpec((tile, spatial_dim), lambda i: (i, 0))
        out_shape = jax.ShapeDtypeStruct((n_rows, spatial_dim), out_dtype)

    out = pl.pallas_call(
        _make_mlp_kernel(n_layers),
        out_shape=out_shape,
        grid=(num_tiles,),
        in_specs=in_specs,
        out_specs=out_specs,
        compiler_params=pltpu.CompilerParams(
            dimension_semantics=("parallel",),
            # Above v5e's 16 MiB scoped default; double-buffered row tiles plus
            # hidden activations at tile_rows=4096 fit comfortably below this on
            # every generation (well under v7x's 64 MiB physical VMEM).
            vmem_limit_bytes=32 * 1024 * 1024,
        ),
    )(flat_node_features, flat_times, *flat_params)

    # Kernel produced a lane-dense [S, N] slab; present the module's [N, S].
    return out.T if transposed_out else out


def _reference_forward(flat_node_features, flat_times, params):
    """Pure-JAX reference matching the PyTorch module."""
    h = jnp.concatenate([flat_node_features, flat_times], axis=-1)
    n_layers = len(params)
    for layer, (w, b) in enumerate(params):
        h = h @ w + b
        if layer < n_layers - 1:
            h = jnp.maximum(h, 0.0)
    return h


if __name__ == "__main__":
    # Shapes consistent with the module:
    #   output_node_features_irreps.dim = 16 (number of MACE features)
    #   hidden_dimensions_size = 32, n_hidden_dimensions = 2, spatial_dimension = 3
    num_mace_features = 16
    hidden_dimensions_size = 32
    n_hidden_dimensions = 2
    spatial_dimension = 3

    key = jax.random.PRNGKey(0)
    k_feat, k_params = jax.random.split(key)

    params = init_mlp_params(
        k_params,
        input_dim=num_mace_features + 1,
        hidden_dim=hidden_dimensions_size,
        n_hidden=n_hidden_dimensions,
        spatial_dim=spatial_dimension,
    )

    ok = True

    def _check(n_rows, prms, **kwargs):
        kf, kt = jax.random.split(jax.random.fold_in(k_feat, n_rows))
        x = jax.random.normal(kf, (n_rows, num_mace_features), dtype=jnp.float32)
        t = jax.random.uniform(kt, (n_rows, 1), dtype=jnp.float32)
        got = jax.block_until_ready(
            mace_mlp_score_prediction_head(x, t, prms, **kwargs))
        exp = _reference_forward(x, t, prms)
        good = got.shape == exp.shape
        good &= bool(jnp.allclose(got, exp, atol=1e-5, rtol=1e-5))
        return good

    # 1) batch=2, atoms=4 -> N=8 (single full block).
    ok &= _check(2 * 4, params)
    # 2) batch=3, atoms=5 -> N=15 (non-multiple-of-8 row count, single block).
    ok &= _check(3 * 5, params)
    # 3) N=1000 with a forced small tile: multi-tile grid + partial last block.
    ok &= _check(1000, params, tile_rows=256)
    # 4) Degenerate head (n_hidden_dimensions=0): single-linear-layer path.
    params_single = init_mlp_params(
        jax.random.fold_in(k_params, 1),
        input_dim=num_mace_features + 1,
        hidden_dim=hidden_dimensions_size,
        n_hidden=0,
        spatial_dim=spatial_dimension,
    )
    ok &= _check(12, params_single)

    assert ok
    print("KERNEL_OK")
</pallas_src>

<mosaic_0001>
module attributes {stable_mosaic.version = 11 : i64} {
  func.func @kernel(%arg0: i32, %arg1: memref<8x16xf32, #tpu.memory_space<vmem>>, %arg2: memref<8x1xf32, #tpu.memory_space<vmem>>, %arg3: memref<16x32xf32, #tpu.memory_space<vmem>>, %arg4: memref<1x32xf32, #tpu.memory_space<vmem>>, %arg5: memref<1x32xf32, #tpu.memory_space<vmem>>, %arg6: memref<32x32xf32, #tpu.memory_space<vmem>>, %arg7: memref<1x32xf32, #tpu.memory_space<vmem>>, %arg8: memref<3x32xf32, #tpu.memory_space<vmem>>, %arg9: memref<3x1xf32, #tpu.memory_space<vmem>>, %arg10: memref<3x8xf32, #tpu.memory_space<vmem>>) attributes {dimension_semantics = [#tpu.dimension_semantics<parallel>], iteration_bounds = array<i64: 1>, scalar_prefetch = 0 : i64, scratch_operands = 0 : i64, tpu.core_type = #tpu.core_type<tc>, window_params = [{transform_indices = @transform_0, window_bounds = array<i64: 8, 16>}, {transform_indices = @transform_1, window_bounds = array<i64: 8, 1>}, {pipeline_mode = #tpu.pipeline_mode<synchronous>, transform_indices = @transform_2, window_bounds = array<i64: 16, 32>}, {pipeline_mode = #tpu.pipeline_mode<synchronous>, transform_indices = @transform_3, window_bounds = array<i64: 1, 32>}, {pipeline_mode = #tpu.pipeline_mode<synchronous>, transform_indices = @transform_4, window_bounds = array<i64: 1, 32>}, {pipeline_mode = #tpu.pipeline_mode<synchronous>, transform_indices = @transform_5, window_bounds = array<i64: 32, 32>}, {pipeline_mode = #tpu.pipeline_mode<synchronous>, transform_indices = @transform_6, window_bounds = array<i64: 1, 32>}, {pipeline_mode = #tpu.pipeline_mode<synchronous>, transform_indices = @transform_7, window_bounds = array<i64: 3, 32>}, {pipeline_mode = #tpu.pipeline_mode<synchronous>, transform_indices = @transform_8, window_bounds = array<i64: 3, 1>}, {transform_indices = @transform_9, window_bounds = array<i64: 3, 8>}]} {
    %c0 = arith.constant 0 : index
    %c0_0 = arith.constant 0 : index
    %0 = vector.load %arg1[%c0, %c0_0] : memref<8x16xf32, #tpu.memory_space<vmem>>, vector<8x16xf32>
    %c0_1 = arith.constant 0 : index
    %c0_2 = arith.constant 0 : index
    %1 = vector.load %arg2[%c0_1, %c0_2] : memref<8x1xf32, #tpu.memory_space<vmem>>, vector<8x1xf32>
    %c0_3 = arith.constant 0 : index
    %c0_4 = arith.constant 0 : index
    %2 = vector.load %arg3[%c0_3, %c0_4] : memref<16x32xf32, #tpu.memory_space<vmem>>, vector<16x32xf32>
    %cst = arith.constant dense<0.000000e+00> : vector<8x32xf32>
    %3 = tpu.matmul %0, %2, %cst {dimension_numbers = #tpu.dot_dimension_numbers<[1], [0], [0], [1], [0, 0, 1, 1], [], []>} : vector<8x16xf32>, vector<16x32xf32>, vector<8x32xf32> -> vector<8x32xf32>
    %c0_5 = arith.constant 0 : index
    %c0_6 = arith.constant 0 : index
    %4 = vector.load %arg4[%c0_5, %c0_6] : memref<1x32xf32, #tpu.memory_space<vmem>>, vector<1x32xf32>
    %5 = vector.broadcast %1 : vector<8x1xf32> to vector<8x32xf32>
    %6 = vector.broadcast %4 : vector<1x32xf32> to vector<8x32xf32>
    %7 = arith.mulf %5, %6 : vector<8x32xf32>
    %8 = arith.addf %3, %7 : vector<8x32xf32>
    %c0_7 = arith.constant 0 : index
    %c0_8 = arith.constant 0 : index
    %9 = vector.load %arg5[%c0_7, %c0_8] : memref<1x32xf32, #tpu.memory_space<vmem>>, vector<1x32xf32>
    %10 = vector.broadcast %9 : vector<1x32xf32> to vector<8x32xf32>
    %11 = arith.addf %8, %10 : vector<8x32xf32>
    %cst_9 = arith.constant 0.000000e+00 : f32
    %12 = vector.broadcast %cst_9 : f32 to vector<8x32xf32>
    %13 = arith.maximumf %11, %12 : vector<8x32xf32>
    %c0_10 = arith.constant 0 : index
    %c0_11 = arith.constant 0 : index
    %14 = vector.load %arg6[%c0_10, %c0_11] : memref<32x32xf32, #tpu.memory_space<vmem>>, vector<32x32xf32>
    %c0_12 = arith.constant 0 : index
    %c0_13 = arith.constant 0 : index
    %15 = vector.load %arg7[%c0_12, %c0_13] : memref<1x32xf32, #tpu.memory_space<vmem>>, vector<1x32xf32>
    %cst_14 = arith.constant dense<0.000000e+00> : vector<8x32xf32>
    %16 = tpu.matmul %13, %14, %cst_14 {dimension_numbers = #tpu.dot_dimension_numbers<[1], [0], [0], [1], [0, 0, 1, 1], [], []>} : vector<8x32xf32>, vector<32x32xf32>, vector<8x32xf32> -> vector<8x32xf32>
    %17 = vector.broadcast %15 : vector<1x32xf32> to vector<8x32xf32>
    %18 = arith.addf %16, %17 : vector<8x32xf32>
    %cst_15 = arith.constant 0.000000e+00 : f32
    %19 = vector.broadcast %cst_15 : f32 to vector<8x32xf32>
    %20 = arith.maximumf %18, %19 : vector<8x32xf32>
    %c0_16 = arith.constant 0 : index
    %c0_17 = arith.constant 0 : index
    %21 = vector.load %arg8[%c0_16, %c0_17] : memref<3x32xf32, #tpu.memory_space<vmem>>, vector<3x32xf32>
    %c0_18 = arith.constant 0 : index
    %c0_19 = arith.constant 0 : index
    %22 = vector.load %arg9[%c0_18, %c0_19] : memref<3x1xf32, #tpu.memory_space<vmem>>, vector<3x1xf32>
    %cst_20 = arith.constant dense<0.000000e+00> : vector<3x8xf32>
    %23 = tpu.matmul %21, %20, %cst_20 {dimension_numbers = #tpu.dot_dimension_numbers<[1], [1], [0], [0], [0, 0, 1, 0], [], []>} : vector<3x32xf32>, vector<8x32xf32>, vector<3x8xf32> -> vector<3x8xf32>
    %24 = vector.broadcast %22 : vector<3x1xf32> to vector<3x8xf32>
    %25 = arith.addf %23, %24 : vector<3x8xf32>
    %c0_21 = arith.constant 0 : index
    %c0_22 = arith.constant 0 : index
    %26 = vector.load %arg10[%c0_21, %c0_22] : memref<3x8xf32, #tpu.memory_space<vmem>>, vector<3x8xf32>
    tpu.vector_store %arg10[%c0_21, %c0_22], %25 {strides = array<i32>} : memref<3x8xf32, #tpu.memory_space<vmem>>, vector<3x8xf32>,
    return
  }
  func.func @transform_0(%arg0: i32) -> (i32, i32) {
    %c0_i32 = arith.constant 0 : i32
    %c0_i32_0 = arith.constant 0 : i32
    return %arg0, %c0_i32 : i32, i32
  }
  func.func @transform_1(%arg0: i32) -> (i32, i32) {
    %c0_i32 = arith.constant 0 : i32
    %c0_i32_0 = arith.constant 0 : i32
    return %arg0, %c0_i32 : i32, i32
  }
  func.func @transform_2(%arg0: i32) -> (i32, i32) {
    %c0_i32 = arith.constant 0 : i32
    %c0_i32_0 = arith.constant 0 : i32
    %c0_i32_1 = arith.constant 0 : i32
    return %c0_i32, %c0_i32_0 : i32, i32
  }
  func.func @transform_3(%arg0: i32) -> (i32, i32) {
    %c0_i32 = arith.constant 0 : i32
    %c0_i32_0 = arith.constant 0 : i32
    %c0_i32_1 = arith.constant 0 : i32
    return %c0_i32, %c0_i32_0 : i32, i32
  }
  func.func @transform_4(%arg0: i32) -> (i32, i32) {
    %c0_i32 = arith.constant 0 : i32
    %c0_i32_0 = arith.constant 0 : i32
    %c0_i32_1 = arith.constant 0 : i32
    return %c0_i32, %c0_i32_0 : i32, i32
  }
  func.func @transform_5(%arg0: i32) -> (i32, i32) {
    %c0_i32 = arith.constant 0 : i32
    %c0_i32_0 = arith.constant 0 : i32
    %c0_i32_1 = arith.constant 0 : i32
    return %c0_i32, %c0_i32_0 : i32, i32
  }
  func.func @transform_6(%arg0: i32) -> (i32, i32) {
    %c0_i32 = arith.constant 0 : i32
    %c0_i32_0 = arith.constant 0 : i32
    %c0_i32_1 = arith.constant 0 : i32
    return %c0_i32, %c0_i32_0 : i32, i32
  }
  func.func @transform_7(%arg0: i32) -> (i32, i32) {
    %c0_i32 = arith.constant 0 : i32
    %c0_i32_0 = arith.constant 0 : i32
    %c0_i32_1 = arith.constant 0 : i32
    return %c0_i32, %c0_i32_0 : i32, i32
  }
  func.func @transform_8(%arg0: i32) -> (i32, i32) {
    %c0_i32 = arith.constant 0 : i32
    %c0_i32_0 = arith.constant 0 : i32
    %c0_i32_1 = arith.constant 0 : i32
    return %c0_i32, %c0_i32_0 : i32, i32
  }
  func.func @transform_9(%arg0: i32) -> (i32, i32) {
    %c0_i32 = arith.constant 0 : i32
    %c0_i32_0 = arith.constant 0 : i32
    return %c0_i32, %arg0 : i32, i32
  }
}

</mosaic_0001>

<llo_original>
// kernel: mace_mlp_score_prediction_head.1
$region0: #{mace_mlp_score_prediction_head.1}
  #allocation0 [shape = 'u32[]', space=smem, size = 0x4, offset = 0x4, fixed_abs, tag = 'smem constant byte address 0x4 - core index']
  #allocation1 [shape = 'u32[144,128]{1,0:T(1,128)}', space=vmem, size = 0x12000, scoped, tag = 'internal scratch']
  %s0 = inlined_call_operand.vmem [shape: f32[8,16], index: 0, kind: input, shape index: {}]
  %s1 = inlined_call_operand.vmem [shape: f32[8,1], index: 1, kind: input, shape index: {}]
  %s2 = inlined_call_operand.vmem [shape: f32[16,32], index: 2, kind: input, shape index: {}]
  %s3 = inlined_call_operand.vmem [shape: f32[1,32], index: 3, kind: input, shape index: {}]
  %s4 = inlined_call_operand.hbm [shape: f32[1,32], index: 4, kind: input, shape index: {}]
  %s5 = inlined_call_operand.vmem [shape: f32[32,32], index: 5, kind: input, shape index: {}]
  %s6 = inlined_call_operand.hbm [shape: f32[1,32], index: 6, kind: input, shape index: {}]
  %s7 = inlined_call_operand.hbm [shape: f32[3,32], index: 7, kind: input, shape index: {}]
  %s8 = inlined_call_operand.vmem [shape: f32[3,1], index: 8, kind: input, shape index: {}]
  %s9 = inlined_call_operand.hbm [shape: f32[3,8], index: 9, kind: output, shape index: {}]
  %s10 = sld [smem:[#allocation0]]
  $region58: #{mace_mlp_score_prediction_head.1} parent=0
    _
  %s12 = ssub.s32 1, %s10
  %s13 = scalar_select 0, %s12, %s10
  $region1: #{mace_mlp_score_prediction_head.1} parent=0
    #allocation2 [shape = 'u8[512]{0}', space=vmem, size = 0x400, scoped, tag = 'input window, operand 4, single buffered']
    #allocation3 [shape = 's32[1]{0}', space=sflag, size = 0x4, scoped, tag = 'scoped memory for mace_mlp_score_prediction_head.1']
    #allocation4 [shape = 's32[1]{0}', space=sflag, size = 0x4, scoped, tag = 'scoped memory for mace_mlp_score_prediction_head.1']
    #allocation5 [shape = 'u8[512]{0}', space=vmem, size = 0x400, scoped, tag = 'input window, operand 6, single buffered']
    #allocation6 [shape = 's32[1]{0}', space=sflag, size = 0x4, scoped, tag = 'scoped memory for mace_mlp_score_prediction_head.1']
    #allocation7 [shape = 'u8[2048]{0}', space=vmem, size = 0x800, scoped, tag = 'input window, operand 7, single buffered']
    #allocation8 [shape = 'u8[2048]{0}', space=vmem, size = 0x800, scoped, tag = 'output window, operand 0, single buffered']
    %14 = vsyncpa [#allocation3], 0
    %15 = vsyncpa [#allocation6], 0
    %16 = vsyncpa [#allocation4], 0
    // Predicated region
    $region2: #{mace_mlp_score_prediction_head.1} parent=1 // pred_check
      _
    $region3: #{mace_mlp_score_prediction_head.1} parent=1 // pred_check_branch
      %18 = sbr.rel (0) target = $region5
    $region4: #{mace_mlp_score_prediction_head.1} parent=1 // pred_region
      _
    $region5: #{mace_mlp_score_prediction_head.1} parent=1 // pred_fallthru
      _
    // Predicated region
    $region6: #{mace_mlp_score_prediction_head.1} parent=1 // pred_check
      _
    $region7: #{mace_mlp_score_prediction_head.1} parent=1 // pred_check_branch
      %20 = sbr.rel (0) target = $region9
    $region8: #{mace_mlp_score_prediction_head.1} parent=1 // pred_region
      _
    $region9: #{mace_mlp_score_prediction_head.1} parent=1 // pred_fallthru
      _
    // Predicated region
    $region10: #{mace_mlp_score_prediction_head.1} parent=1 // pred_check
      _
    $region11: #{mace_mlp_score_prediction_head.1} parent=1 // pred_check_branch
      %22 = sbr.rel (0) target = $region13
    $region12: #{mace_mlp_score_prediction_head.1} parent=1 // pred_region
      _
    $region13: #{mace_mlp_score_prediction_head.1} parent=1 // pred_fallthru
      _
    // Predicated region
    $region14: #{mace_mlp_score_prediction_head.1} parent=1 // pred_check
      _
    $region15: #{mace_mlp_score_prediction_head.1} parent=1 // pred_check_branch
      %24 = sbr.rel (0) target = $region17
    $region16: #{mace_mlp_score_prediction_head.1} parent=1 // pred_region
      _
    $region17: #{mace_mlp_score_prediction_head.1} parent=1 // pred_fallthru
      _
    // Predicated region
    $region18: #{mace_mlp_score_prediction_head.1} parent=1 // pred_check
      _
    $region19: #{mace_mlp_score_prediction_head.1} parent=1 // pred_check_branch
      %26 = sbr.rel (0) target = $region21
    $region20: #{mace_mlp_score_prediction_head.1} parent=1 // pred_region
      %s28 = ssub.s32 16, 16
      %29 = vsyncadd [#allocation3], %s28
      %s31 = sshll.u32 [#allocation2], 4
      %s32 = int_to_ptr.vmem [resolvable:$true] %s31
      %34 = dma.hbm_to_vmem [thread:$0]  %s4, 16, %s32, [#allocation3]
    $region21: #{mace_mlp_score_prediction_head.1} parent=1 // pred_fallthru
      _
    // Predicated region
    $region22: #{mace_mlp_score_prediction_head.1} parent=1 // pred_check
      _
    $region23: #{mace_mlp_score_prediction_head.1} parent=1 // pred_check_branch
      %36 = sbr.rel (0) target = $region25
    $region24: #{mace_mlp_score_prediction_head.1} parent=1 // pred_region
      _
    $region25: #{mace_mlp_score_prediction_head.1} parent=1 // pred_fallthru
      _
    // Predicated region
    $region26: #{mace_mlp_score_prediction_head.1} parent=1 // pred_check
      _
    $region27: #{mace_mlp_score_prediction_head.1} parent=1 // pred_check_branch
      %38 = sbr.rel (0) target = $region29
    $region28: #{mace_mlp_score_prediction_head.1} parent=1 // pred_region
      %s40 = ssub.s32 16, 16
      %41 = vsyncadd [#allocation6], %s40
      %s43 = sshll.u32 [#allocation5], 4
      %s44 = int_to_ptr.vmem [resolvable:$true] %s43
      %46 = dma.hbm_to_vmem [thread:$0]  %s6, 16, %s44, [#allocation6]
    $region29: #{mace_mlp_score_prediction_head.1} parent=1 // pred_fallthru
      _
    // Predicated region
    $region30: #{mace_mlp_score_prediction_head.1} parent=1 // pred_check
      _
    $region31: #{mace_mlp_score_prediction_head.1} parent=1 // pred_check_branch
      %48 = sbr.rel (0) target = $region33
    $region32: #{mace_mlp_score_prediction_head.1} parent=1 // pred_region
      %s50 = ssub.s32 64, 64
      %51 = vsyncadd [#allocation6], %s50
      %s53 = sshll.u32 [#allocation7], 4
      %s54 = int_to_ptr.vmem [resolvable:$true] %s53
      %56 = dma.hbm_to_vmem [thread:$0]  %s7, 64, %s54, [#allocation6]
    $region33: #{mace_mlp_score_prediction_head.1} parent=1 // pred_fallthru
      _
    // Predicated region
    $region34: #{mace_mlp_score_prediction_head.1} parent=1 // pred_check
      _
    $region35: #{mace_mlp_score_prediction_head.1} parent=1 // pred_check_branch
      %58 = sbr.rel (0) target = $region37
    $region36: #{mace_mlp_score_prediction_head.1} parent=1 // pred_region
      _
    $region37: #{mace_mlp_score_prediction_head.1} parent=1 // pred_fallthru
      _
    // Predicated region
    $region38: #{mace_mlp_score_prediction_head.1} parent=1 // pred_check
      _
    $region39: #{mace_mlp_score_prediction_head.1} parent=1 // pred_check_branch
      %60 = sbr.rel (0) target = $region41
    $region40: #{mace_mlp_score_prediction_head.1} parent=1 // pred_region
      %61 = dma.done [#allocation3], 16
    $region41: #{mace_mlp_score_prediction_head.1} parent=1 // pred_fallthru
      _
    // Predicated region
    $region42: #{mace_mlp_score_prediction_head.1} parent=1 // pred_check
      _
    $region43: #{mace_mlp_score_prediction_head.1} parent=1 // pred_check_branch
      %63 = sbr.rel (0) target = $region45
    $region44: #{mace_mlp_score_prediction_head.1} parent=1 // pred_region
      %64 = dma.done [#allocation6], 16
    $region45: #{mace_mlp_score_prediction_head.1} parent=1 // pred_fallthru
      _
    // Predicated region
    $region46: #{mace_mlp_score_prediction_head.1} parent=1 // pred_check
      _
    $region47: #{mace_mlp_score_prediction_head.1} parent=1 // pred_check_branch
      %66 = sbr.rel (0) target = $region49
    $region48: #{mace_mlp_score_prediction_head.1} parent=1 // pred_region
      %67 = dma.done [#allocation6], 64
    $region49: #{mace_mlp_score_prediction_head.1} parent=1 // pred_fallthru
      _
    %v68 = vld [vmem:[%s0] sm:$0xff]
    %v69 = vld [vmem:[%s1] sm:$0xff]
    %v70 = vld [vmem:[%s2] sm:$0xff]
    %v71 = vld [vmem:[%s2 + $0x8] sm:$0xff]
    %v72 = vld [vmem:[%s3] sm:$0x1]
    %74 = vset.pattern.permute.xlu0 0
    %75 = vperm.xlu0 %74, %v69
    %v76 = vpop.permute.xlu0 %75
    %v79 = vlaneseq
    %v80 = vshrl.u32 %v79, 7
    %v81 = vsub.s32 0, %v80
    %v82 = vrot.slane %v72, %v81
    %v84 = vmul.f32 %v76, %v82
    %vm85 = vcmask 130048
    %v87 = vsel %vm85, %v68, 0
    %89 = vmatprep.subr.mxu0 0.0
    %90 = vmatpush1.msra.mxu0 0.0
    %91 = vmatprep.subr.mxu0 0.0
    %92 = vmatpush1.msra.mxu0 0.0
    %93 = vmatprep.subr.mxu0 0.0
    %94 = vmatpush1.msra.mxu0 0.0
    %95 = vmatprep.subr.mxu0 0.0
    %96 = vmatpush1.msra.mxu0 0.0
    %97 = vmatprep.subr.mxu0 0.0
    %98 = vmatpush1.msra.mxu0 0.0
    %99 = vmatprep.subr.mxu0 0.0
    %100 = vmatpush1.msra.mxu0 0.0
    %101 = vmatprep.subr.mxu0 0.0
    %102 = vmatpush1.msra.mxu0 0.0
    %103 = vmatprep.subr.mxu0 0.0
    %104 = vmatpush1.msra.mxu0 0.0
    %105 = vmatprep.subr.mxu0 0.0
    %106 = vmatpush1.msra.mxu0 0.0
    %107 = vmatprep.subr.mxu0 0.0
    %108 = vmatpush1.msra.mxu0 0.0
    %109 = vmatprep.subr.mxu0 0.0
    %110 = vmatpush1.msra.mxu0 0.0
    %111 = vmatprep.subr.mxu0 0.0
    %112 = vmatpush1.msra.mxu0 0.0
    %113 = vmatprep.subr.mxu0 0.0
    %114 = vmatpush1.msra.mxu0 0.0
    %115 = vmatprep.subr.mxu0 0.0
    %116 = vmatpush1.msra.mxu0 0.0
    %117 = vmatprep.subr.mxu0 0.0
    %118 = vmatpush1.msra.mxu0 %v71
    %119 = vmatprep.subr.mxu0 0.0
    %120 = vmatpush1.msra.mxu0 %v70
    %121 = vmatprep.subr.mxu0 0.0
    %122 = vmatpush2.msra.mxu0 0.0
    %123 = vmatprep.subr.mxu0 0.0
    %124 = vmatpush2.msra.mxu0 0.0
    %125 = vmatprep.subr.mxu0 0.0
    %126 = vmatpush2.msra.mxu0 0.0
    %127 = vmatprep.subr.mxu0 0.0
    %128 = vmatpush2.msra.mxu0 0.0
    %129 = vmatprep.subr.mxu0 0.0
    %130 = vmatpush2.msra.mxu0 0.0
    %131 = vmatprep.subr.mxu0 0.0
    %132 = vmatpush2.msra.mxu0 0.0
    %133 = vmatprep.subr.mxu0 0.0
    %134 = vmatpush2.msra.mxu0 0.0
    %135 = vmatprep.subr.mxu0 0.0
    %136 = vmatpush2.msra.mxu0 0.0
    %137 = vmatprep.subr.mxu0 0.0
    %138 = vmatpush2.msra.mxu0 0.0
    %139 = vmatprep.subr.mxu0 0.0
    %140 = vmatpush2.msra.mxu0 0.0
    %141 = vmatprep.subr.mxu0 0.0
    %142 = vmatpush2.msra.mxu0 0.0
    %143 = vmatprep.subr.mxu0 0.0
    %144 = vmatpush2.msra.mxu0 0.0
    %145 = vmatprep.subr.mxu0 0.0
    %146 = vmatpush2.msra.mxu0 0.0
    %147 = vmatprep.subr.mxu0 0.0
    %148 = vmatpush2.msra.mxu0 0.0
    %149 = vmatprep.subr.mxu0 0.0
    %150 = vmatpush2.msra.mxu0 0.0
    %151 = vmatprep.subr.mxu0 0.0
    %152 = vmatpush2.msra.mxu0 0.0
    %153 = vmatprep.mubr.f32.mxu0 0.0
    %154 = vmatmul.mubr.f32.gmra.mxu0 %v87
    %v155 = vpop.f32.mrf.mxu0
    %v156 = vadd.f32 %v84, %v155
    %v157 = vpop.f32.mrf.mxu0
    %158 = vdwg.mxu0
    %v159 = vld [vmem:[#allocation2] sm:$0x1]
    %v161 = vlaneseq
    %v162 = vshrl.u32 %v161, 7
    %v163 = vsub.s32 0, %v162
    %v164 = vrot.slane %v159, %v163
    %v166 = vadd.f32 %v156, %v164
    %v167 = vmax.f32 %v166, 0.0
    %v168 = vld [vmem:[%s5] sm:$0xff]
    %v169 = vld [vmem:[%s5 + $0x8] sm:$0xff]
    %v170 = vld [vmem:[%s5 + $0x10] sm:$0xff]
    %v171 = vld [vmem:[%s5 + $0x18] sm:$0xff]
    %v172 = vld [vmem:[#allocation5] sm:$0x1]
    %v174 = vlaneseq
    %v175 = vshrl.u32 %v174, 7
    %v176 = vsub.s32 0, %v175
    %v177 = vrot.slane %v172, %v176
    %vm179 = vcmask 261120
    %v181 = vsel %vm179, %v167, 0
    %183 = vmatprep.subr.mxu0 0.0
    %184 = vmatpush1.msra.mxu0 0.0
    %185 = vmatprep.subr.mxu0 0.0
    %186 = vmatpush1.msra.mxu0 0.0
    %187 = vmatprep.subr.mxu0 0.0
    %188 = vmatpush1.msra.mxu0 0.0
    %189 = vmatprep.subr.mxu0 0.0
    %190 = vmatpush1.msra.mxu0 0.0
    %191 = vmatprep.subr.mxu0 0.0
    %192 = vmatpush1.msra.mxu0 0.0
    %193 = vmatprep.subr.mxu0 0.0
    %194 = vmatpush1.msra.mxu0 0.0
    %195 = vmatprep.subr.mxu0 0.0
    %196 = vmatpush1.msra.mxu0 0.0
    %197 = vmatprep.subr.mxu0 0.0
    %198 = vmatpush1.msra.mxu0 0.0
    %199 = vmatprep.subr.mxu0 0.0
    %200 = vmatpush1.msra.mxu0 0.0
    %201 = vmatprep.subr.mxu0 0.0
    %202 = vmatpush1.msra.mxu0 0.0
    %203 = vmatprep.subr.mxu0 0.0
    %204 = vmatpush1.msra.mxu0 0.0
    %205 = vmatprep.subr.mxu0 0.0
    %206 = vmatpush1.msra.mxu0 0.0
    %207 = vmatprep.subr.mxu0 0.0
    %208 = vmatpush1.msra.mxu0 %v171
    %209 = vmatprep.subr.mxu0 0.0
    %210 = vmatpush1.msra.mxu0 %v170
    %211 = vmatprep.subr.mxu0 0.0
    %212 = vmatpush1.msra.mxu0 %v169
    %213 = vmatprep.subr.mxu0 0.0
    %214 = vmatpush1.msra.mxu0 %v168
    %215 = vmatprep.subr.mxu0 0.0
    %216 = vmatpush2.msra.mxu0 0.0
    %217 = vmatprep.subr.mxu0 0.0
    %218 = vmatpush2.msra.mxu0 0.0
    %219 = vmatprep.subr.mxu0 0.0
    %220 = vmatpush2.msra.mxu0 0.0
    %221 = vmatprep.subr.mxu0 0.0
    %222 = vmatpush2.msra.mxu0 0.0
    %223 = vmatprep.subr.mxu0 0.0
    %224 = vmatpush2.msra.mxu0 0.0
    %225 = vmatprep.subr.mxu0 0.0
    %226 = vmatpush2.msra.mxu0 0.0
    %227 = vmatprep.subr.mxu0 0.0
    %228 = vmatpush2.msra.mxu0 0.0
    %229 = vmatprep.subr.mxu0 0.0
    %230 = vmatpush2.msra.mxu0 0.0
    %231 = vmatprep.subr.mxu0 0.0
    %232 = vmatpush2.msra.mxu0 0.0
    %233 = vmatprep.subr.mxu0 0.0
    %234 = vmatpush2.msra.mxu0 0.0
    %235 = vmatprep.subr.mxu0 0.0
    %236 = vmatpush2.msra.mxu0 0.0
    %237 = vmatprep.subr.mxu0 0.0
    %238 = vmatpush2.msra.mxu0 0.0
    %239 = vmatprep.subr.mxu0 0.0
    %240 = vmatpush2.msra.mxu0 0.0
    %241 = vmatprep.subr.mxu0 0.0
    %242 = vmatpush2.msra.mxu0 0.0
    %243 = vmatprep.subr.mxu0 0.0
    %244 = vmatpush2.msra.mxu0 0.0
    %245 = vmatprep.subr.mxu0 0.0
    %246 = vmatpush2.msra.mxu0 0.0
    %247 = vmatprep.mubr.f32.mxu0 0.0
    %248 = vmatmul.mubr.f32.gmra.mxu0 %v181
    %v249 = vpop.f32.mrf.mxu0
    %v250 = vadd.f32 %v177, %v249
    %v251 = vpop.f32.mrf.mxu0
    %252 = vdwg.mxu0
    %v253 = vmax.f32 %v250, 0.0
    %v254 = vld [vmem:[#allocation7] sm:$0x7]
    %v255 = vld [vmem:[%s8] sm:$0x7]
    %257 = vset.pattern.permute.xlu0 0
    %258 = vperm.xlu0 %257, %v255
    %v259 = vpop.permute.xlu0 %258
    %v262 = vsel %vm179, %v254, 0
    %v265 = vsel %vm179, %v253, 0
    %267 = vmatprep.subr.mxu0 0.0
    %268 = vmatpush1.xpose.msra.mxu0 0.0
    %269 = vmatprep.subr.mxu0 0.0
    %270 = vmatpush1.xpose.msra.mxu0 0.0
    %271 = vmatprep.subr.mxu0 0.0
    %272 = vmatpush1.xpose.msra.mxu0 0.0
    %273 = vmatprep.subr.mxu0 0.0
    %274 = vmatpush1.xpose.msra.mxu0 0.0
    %275 = vmatprep.subr.mxu0 0.0
    %276 = vmatpush1.xpose.msra.mxu0 0.0
    %277 = vmatprep.subr.mxu0 0.0
    %278 = vmatpush1.xpose.msra.mxu0 0.0
    %279 = vmatprep.subr.mxu0 0.0
    %280 = vmatpush1.xpose.msra.mxu0 0.0
    %281 = vmatprep.subr.mxu0 0.0
    %282 = vmatpush1.xpose.msra.mxu0 0.0
    %283 = vmatprep.subr.mxu0 0.0
    %284 = vmatpush1.xpose.msra.mxu0 0.0
    %285 = vmatprep.subr.mxu0 0.0
    %286 = vmatpush1.xpose.msra.mxu0 0.0
    %287 = vmatprep.subr.mxu0 0.0
    %288 = vmatpush1.xpose.msra.mxu0 0.0
    %289 = vmatprep.subr.mxu0 0.0
    %290 = vmatpush1.xpose.msra.mxu0 0.0
    %291 = vmatprep.subr.mxu0 0.0
    %292 = vmatpush1.xpose.msra.mxu0 0.0
    %293 = vmatprep.subr.mxu0 0.0
    %294 = vmatpush1.xpose.msra.mxu0 0.0
    %295 = vmatprep.subr.mxu0 0.0
    %296 = vmatpush1.xpose.msra.mxu0 0.0
    %297 = vmatprep.subr.mxu0 0.0
    %298 = vmatpush1.xpose.msra.mxu0 %v265
    %299 = vmatprep.subr.mxu0 0.0
    %300 = vmatpush2.xpose.msra.mxu0 0.0
    %301 = vmatprep.subr.mxu0 0.0
    %302 = vmatpush2.xpose.msra.mxu0 0.0
    %303 = vmatprep.subr.mxu0 0.0
    %304 = vmatpush2.xpose.msra.mxu0 0.0
    %305 = vmatprep.subr.mxu0 0.0
    %306 = vmatpush2.xpose.msra.mxu0 0.0
    %307 = vmatprep.subr.mxu0 0.0
    %308 = vmatpush2.xpose.msra.mxu0 0.0
    %309 = vmatprep.subr.mxu0 0.0
    %310 = vmatpush2.xpose.msra.mxu0 0.0
    %311 = vmatprep.subr.mxu0 0.0
    %312 = vmatpush2.xpose.msra.mxu0 0.0
    %313 = vmatprep.subr.mxu0 0.0
    %314 = vmatpush2.xpose.msra.mxu0 0.0
    %315 = vmatprep.subr.mxu0 0.0
    %316 = vmatpush2.xpose.msra.mxu0 0.0
    %317 = vmatprep.subr.mxu0 0.0
    %318 = vmatpush2.xpose.msra.mxu0 0.0
    %319 = vmatprep.subr.mxu0 0.0
    %320 = vmatpush2.xpose.msra.mxu0 0.0
    %321 = vmatprep.subr.mxu0 0.0
    %322 = vmatpush2.xpose.msra.mxu0 0.0
    %323 = vmatprep.subr.mxu0 0.0
    %324 = vmatpush2.xpose.msra.mxu0 0.0
    %325 = vmatprep.subr.mxu0 0.0
    %326 = vmatpush2.xpose.msra.mxu0 0.0
    %327 = vmatprep.subr.mxu0 0.0
    %328 = vmatpush2.xpose.msra.mxu0 0.0
    %329 = vmatprep.subr.mxu0 0.0
    %330 = vmatpush2.xpose.msra.mxu0 0.0
    %331 = vmatprep.mubr.f32.mxu0 0.0
    %332 = vmatmul.mubr.f32.gmra.mxu0 %v262
    %v333 = vpop.f32.mrf.mxu0
    %v334 = vadd.f32 %v259, %v333
    %v335 = vpop.f32.mrf.mxu0
    %336 = vdwg.mxu0
    %vm337 = vcmask 59392
    %338 = vst.msk [vmem:[#allocation8] sm:$0x7] %vm337, %v334
    // Predicated region
    $region50: #{mace_mlp_score_prediction_head.1} parent=1 // pred_check
      _
    $region51: #{mace_mlp_score_prediction_head.1} parent=1 // pred_check_branch
      %340 = sbr.rel (0) target = $region53
    $region52: #{mace_mlp_score_prediction_head.1} parent=1 // pred_region
      %s342 = ssub.s32 64, 64
      %343 = vsyncadd [#allocation4], %s342
      %s345 = sshll.u32 [#allocation8], 4
      %s346 = int_to_ptr.vmem [resolvable:$true] %s345
      %348 = dma.vmem_to_hbm [thread:$0]  %s346, 64, %s9, [#allocation4]
    $region53: #{mace_mlp_score_prediction_head.1} parent=1 // pred_fallthru
      _
    // Predicated region
    $region54: #{mace_mlp_score_prediction_head.1} parent=1 // pred_check
      _
    $region55: #{mace_mlp_score_prediction_head.1} parent=1 // pred_check_branch
      %350 = sbr.rel (0) target = $region57
    $region56: #{mace_mlp_score_prediction_head.1} parent=1 // pred_region
      %351 = dma.done [#allocation4], 64
    $region57: #{mace_mlp_score_prediction_head.1} parent=1 // pred_fallthru
      _
    %352 = vsyncpa [#allocation3], 1
    %353 = vsyncpa [#allocation6], 1
    %354 = vsyncpa [#allocation4], 1

</llo_original>
